<compile_context>
chip_gen: v6e
topology: v6e:2x2x1
jax: 0.10.0
libtpu: 0.0.40
codegen_flags: <defaults>
</compile_context>

<pallas_src>
import numpy as np
import jax
import jax.numpy as jnp
from jax.experimental import pallas as pl
from jax.experimental.pallas import tpu as pltpu


# ---------------------------------------------------------------------------
# Kernel: fused 2-layer MLP (matmul -> bias -> relu -> matmul -> bias)
# One grid step processes a (TB, D) slab of the batch; weights stay resident
# (constant index_map), x/out tiles are double-buffered by the pipeline.
# ---------------------------------------------------------------------------
def agent_actor_kernel(x_ref, w1_ref, b1_ref, w2_ref, b2_ref, o_ref):
    # Cast x inside the kernel: hidden in the pipeline, avoids a separate
    # wrapper-side pass over x in HBM when the compute dtype is bf16.
    x = x_ref[...].astype(w1_ref.dtype)                       # (TB, D)

    # Layer 1: MXU matmul with f32 accumulation; bias + ReLU in f32.
    h = jnp.dot(x, w1_ref[...], preferred_element_type=jnp.float32)
    h = jnp.maximum(h + b1_ref[...].astype(jnp.float32), 0.0)

    # Layer 2: cast activations back to the matmul input dtype.
    logits = jnp.dot(h.astype(w2_ref.dtype), w2_ref[...],
                     preferred_element_type=jnp.float32)
    o_ref[...] = (logits + b2_ref[...].astype(jnp.float32)).astype(o_ref.dtype)

# TODO(synk): get_action_and_value (critic head + Categorical sample/logprob/
# entropy) could be fused here to reuse the x tile and the ReLU activations;
# forward() only requires the actor, so it is not emitted.


def _round_up(n, m):
    return ((n + m - 1) // m) * m


def _device_vmem_bytes():
    try:
        return int(pltpu.get_tpu_info().vmem_capacity_bytes)
    except Exception:
        return 64 * 1024 * 1024  # conservative per-TC floor (v7x)


def prepare_agent_params(w1, b1, w2, b2, compute_dtype=jnp.float32):
    """One-time (per param update) weight prep. Hoisted out of the per-call
    path: only the matmul inputs are cast; biases stay f32."""
    return (w1.astype(compute_dtype), jnp.asarray(b1, jnp.float32),
            w2.astype(compute_dtype), jnp.asarray(b2, jnp.float32))


def agent_forward(x, w1, b1, w2, b2, *, block_b=4096):
    """Actor forward: (B, num_inputs) -> (B, num_outputs) f32 logits.

    Compute dtype follows the weight dtype (pass bf16 weights, e.g. via
    prepare_agent_params, for bf16 MXU inputs); accumulation is always f32.
    """
    B, D = x.shape
    H = w1.shape[1]
    A = w2.shape[1]
    assert w1.shape == (D, H) and w2.shape == (H, A)

    # ---- batch tile: large, (8, *)-aligned; keep >= 2 blocks when there is
    # enough work so the "parallel" axis actually splits across v7x's 2 TCs.
    tb = min(block_b, _round_up(B, 8))
    if B > 8 and pl.cdiv(B, tb) < 2:
        tb = max(8, _round_up(pl.cdiv(B, 2), 8))
    grid = (pl.cdiv(B, tb),)   # partial last block OK: batch rows independent

    # ---- VMEM footprint with lane/sublane padding of every tile ----
    it_x = jnp.dtype(x.dtype).itemsize
    it_w = jnp.dtype(w1.dtype).itemsize
    Dl, Hl, Al = _round_up(D, 128), _round_up(H, 128), _round_up(A, 128)
    est_vmem = (2 * tb * Dl * it_x                                # x (2 bufs)
                + 2 * tb * Al * 4                                 # out (2 bufs)
                + 2 * (_round_up(D, 8) * Hl + _round_up(H, 8) * Al) * it_w
                + 2 * (8 * Hl + 8 * Al) * 4                       # biases
                + (1 << 20))                                      # slack
    vmem_limit = None
    if est_vmem > 16 * 1024 * 1024:            # v5e default scoped limit
        vmem_limit = int(min(2 * est_vmem, _device_vmem_bytes() - (4 << 20)))

    cost = pl.CostEstimate(
        flops=2 * B * (D * H + H * A),
        transcendentals=0,
        bytes_accessed=(B * D * it_x + (D * H + H * A) * it_w
                        + (H + A) * 4 + B * A * 4),
    )

    return pl.pallas_call(
        agent_actor_kernel,
        out_shape=jax.ShapeDtypeStruct((B, A), jnp.float32),
        grid=grid,
        in_specs=[
            pl.BlockSpec((tb, D), lambda i: (i, 0)),   # x: tiled over batch
            pl.BlockSpec((D, H), lambda i: (0, 0)),    # w1: resident
            pl.BlockSpec((1, H), lambda i: (0, 0)),    # b1: resident
            pl.BlockSpec((H, A), lambda i: (0, 0)),    # w2: resident
            pl.BlockSpec((1, A), lambda i: (0, 0)),    # b2: resident
        ],
        # True head width (block last dim == full array dim): lane-masked
        # stores are fine here, and HBM writeback is only B*A*4 bytes.
        out_specs=pl.BlockSpec((tb, A), lambda i: (i, 0)),
        compiler_params=pltpu.CompilerParams(
            dimension_semantics=("parallel",),         # megacore on v7x
            vmem_limit_bytes=vmem_limit,
        ),
        cost_estimate=cost,
    )(x, w1, b1, w2, b2)


# ---------------------------------------------------------------------------
# Deterministic parameter init (mirrors layer_init: orthogonal weight * std,
# bias = 0). Orthogonal init via QR decomposition of a gaussian matrix.
# ---------------------------------------------------------------------------
def orthogonal_init(key, shape, std):
    n_in, n_out = shape
    big = max(n_in, n_out)
    a = jax.random.normal(key, (big, big), dtype=jnp.float32)
    q, r = jnp.linalg.qr(a)
    q = q * jnp.sign(jnp.diag(r))[None, :]
    return (std * q[:n_in, :n_out]).astype(jnp.float32)


def make_agent_params(key, num_inputs, num_outputs, hidden_size=256):
    k1, k2 = jax.random.split(key)
    w1 = orthogonal_init(k1, (num_inputs, hidden_size), std=float(np.sqrt(2)))
    b1 = jnp.zeros((1, hidden_size), dtype=jnp.float32)
    w2 = orthogonal_init(k2, (hidden_size, num_outputs), std=0.01)
    b2 = jnp.zeros((1, num_outputs), dtype=jnp.float32)
    return w1, b1, w2, b2


if __name__ == "__main__":
    # Small shapes consistent with the module's forward pass.
    batch = 8
    num_inputs = 16
    num_outputs = 8
    hidden_size = 32

    key = jax.random.PRNGKey(0)
    kx, kp = jax.random.split(key)

    x = jax.random.normal(kx, (batch, num_inputs), dtype=jnp.float32)
    w1, b1, w2, b2 = make_agent_params(kp, num_inputs, num_outputs, hidden_size)

    # Reference (same math as the PyTorch module, f32).
    ref = jnp.maximum(x @ w1 + b1, 0.0) @ w2 + b2

    # 1) Default f32 path: matches the PyTorch module numerics.
    logits = jax.block_until_ready(agent_forward(x, w1, b1, w2, b2))
    assert logits.shape == (batch, num_outputs)
    np.testing.assert_allclose(np.asarray(logits), np.asarray(ref),
                               rtol=1e-5, atol=1e-5)

    # 2) Opt-in bf16 MXU inputs (weights cast once, x cast in-kernel).
    p_bf16 = prepare_agent_params(w1, b1, w2, b2, jnp.bfloat16)
    logits_bf16 = jax.block_until_ready(agent_forward(x, *p_bf16))
    np.testing.assert_allclose(np.asarray(logits_bf16), np.asarray(ref),
                               rtol=2e-2, atol=2e-2)

    # 3) Multi-block grid with a partial last block (B=20, tb=16).
    x2 = jax.random.normal(jax.random.PRNGKey(1), (20, num_inputs),
                           dtype=jnp.float32)
    ref2 = jnp.maximum(x2 @ w1 + b1, 0.0) @ w2 + b2
    out2 = jax.block_until_ready(agent_forward(x2, w1, b1, w2, b2, block_b=16))
    assert out2.shape == (20, num_outputs)
    np.testing.assert_allclose(np.asarray(out2), np.asarray(ref2),
                               rtol=1e-5, atol=1e-5)

    print("KERNEL_OK")
</pallas_src>

<mosaic_0001>
module attributes {stable_mosaic.version = 11 : i64} {
  func.func @agent_actor_kernel(%arg0: i32, %arg1: memref<8x16xf32, #tpu.memory_space<vmem>>, %arg2: memref<16x32xf32, #tpu.memory_space<vmem>>, %arg3: memref<1x32xf32, #tpu.memory_space<vmem>>, %arg4: memref<32x8xf32, #tpu.memory_space<vmem>>, %arg5: memref<1x8xf32, #tpu.memory_space<vmem>>, %arg6: memref<8x8xf32, #tpu.memory_space<vmem>>) attributes {dimension_semantics = [#tpu.dimension_semantics<parallel>], iteration_bounds = array<i64: 1>, scalar_prefetch = 0 : i64, scratch_operands = 0 : i64, tpu.core_type = #tpu.core_type<tc>, window_params = [{transform_indices = @transform_0, window_bounds = array<i64: 8, 16>}, {pipeline_mode = #tpu.pipeline_mode<synchronous>, transform_indices = @transform_1, window_bounds = array<i64: 16, 32>}, {pipeline_mode = #tpu.pipeline_mode<synchronous>, transform_indices = @transform_2, window_bounds = array<i64: 1, 32>}, {pipeline_mode = #tpu.pipeline_mode<synchronous>, transform_indices = @transform_3, window_bounds = array<i64: 32, 8>}, {pipeline_mode = #tpu.pipeline_mode<synchronous>, transform_indices = @transform_4, window_bounds = array<i64: 1, 8>}, {transform_indices = @transform_5, window_bounds = array<i64: 8, 8>}]} {
    %c0 = arith.constant 0 : index
    %c0_0 = arith.constant 0 : index
    %0 = vector.load %arg1[%c0, %c0_0] : memref<8x16xf32, #tpu.memory_space<vmem>>, vector<8x16xf32>
    %c0_1 = arith.constant 0 : index
    %c0_2 = arith.constant 0 : index
    %1 = vector.load %arg2[%c0_1, %c0_2] : memref<16x32xf32, #tpu.memory_space<vmem>>, vector<16x32xf32>
    %cst = arith.constant dense<0.000000e+00> : vector<8x32xf32>
    %2 = tpu.matmul %0, %1, %cst {dimension_numbers = #tpu.dot_dimension_numbers<[1], [0], [0], [1], [0, 0, 1, 1], [], []>} : vector<8x16xf32>, vector<16x32xf32>, vector<8x32xf32> -> vector<8x32xf32>
    %c0_3 = arith.constant 0 : index
    %c0_4 = arith.constant 0 : index
    %3 = vector.load %arg3[%c0_3, %c0_4] : memref<1x32xf32, #tpu.memory_space<vmem>>, vector<1x32xf32>
    %4 = vector.broadcast %3 : vector<1x32xf32> to vector<8x32xf32>
    %5 = arith.addf %2, %4 : vector<8x32xf32>
    %cst_5 = arith.constant 0.000000e+00 : f32
    %6 = vector.broadcast %cst_5 : f32 to vector<8x32xf32>
    %7 = arith.maximumf %5, %6 : vector<8x32xf32>
    %c0_6 = arith.constant 0 : index
    %c0_7 = arith.constant 0 : index
    %8 = vector.load %arg4[%c0_6, %c0_7] : memref<32x8xf32, #tpu.memory_space<vmem>>, vector<32x8xf32>
    %cst_8 = arith.constant dense<0.000000e+00> : vector<8x8xf32>
    %9 = tpu.matmul %7, %8, %cst_8 {dimension_numbers = #tpu.dot_dimension_numbers<[1], [0], [0], [1], [0, 0, 1, 1], [], []>} : vector<8x32xf32>, vector<32x8xf32>, vector<8x8xf32> -> vector<8x8xf32>
    %c0_9 = arith.constant 0 : index
    %c0_10 = arith.constant 0 : index
    %10 = vector.load %arg5[%c0_9, %c0_10] : memref<1x8xf32, #tpu.memory_space<vmem>>, vector<1x8xf32>
    %11 = vector.broadcast %10 : vector<1x8xf32> to vector<8x8xf32>
    %12 = arith.addf %9, %11 : vector<8x8xf32>
    %c0_11 = arith.constant 0 : index
    %c0_12 = arith.constant 0 : index
    %13 = vector.load %arg6[%c0_11, %c0_12] : memref<8x8xf32, #tpu.memory_space<vmem>>, vector<8x8xf32>
    tpu.vector_store %arg6[%c0_11, %c0_12], %12 {strides = array<i32>} : memref<8x8xf32, #tpu.memory_space<vmem>>, vector<8x8xf32>,
    return
  }
  func.func @transform_0(%arg0: i32) -> (i32, i32) {
    %c0_i32 = arith.constant 0 : i32
    %c0_i32_0 = arith.constant 0 : i32
    return %arg0, %c0_i32 : i32, i32
  }
  func.func @transform_1(%arg0: i32) -> (i32, i32) {
    %c0_i32 = arith.constant 0 : i32
    %c0_i32_0 = arith.constant 0 : i32
    %c0_i32_1 = arith.constant 0 : i32
    return %c0_i32, %c0_i32_0 : i32, i32
  }
  func.func @transform_2(%arg0: i32) -> (i32, i32) {
    %c0_i32 = arith.constant 0 : i32
    %c0_i32_0 = arith.constant 0 : i32
    %c0_i32_1 = arith.constant 0 : i32
    return %c0_i32, %c0_i32_0 : i32, i32
  }
  func.func @transform_3(%arg0: i32) -> (i32, i32) {
    %c0_i32 = arith.constant 0 : i32
    %c0_i32_0 = arith.constant 0 : i32
    %c0_i32_1 = arith.constant 0 : i32
    return %c0_i32, %c0_i32_0 : i32, i32
  }
  func.func @transform_4(%arg0: i32) -> (i32, i32) {
    %c0_i32 = arith.constant 0 : i32
    %c0_i32_0 = arith.constant 0 : i32
    %c0_i32_1 = arith.constant 0 : i32
    return %c0_i32, %c0_i32_0 : i32, i32
  }
  func.func @transform_5(%arg0: i32) -> (i32, i32) {
    %c0_i32 = arith.constant 0 : i32
    %c0_i32_0 = arith.constant 0 : i32
    return %arg0, %c0_i32 : i32, i32
  }
}

</mosaic_0001>

<llo_original>
// kernel: tpu_custom_call.1
$region0: #{tpu_custom_call.1}
  #allocation0 [shape = 'u32[]', space=smem, size = 0x4, offset = 0x4, fixed_abs, tag = 'smem constant byte address 0x4 - core index']
  #allocation1 [shape = 'u32[144,128]{1,0:T(1,128)}', space=vmem, size = 0x12000, scoped, tag = 'internal scratch']
  %s0 = inlined_call_operand.vmem [shape: f32[8,16], index: 0, kind: input, shape index: {}]
  %s1 = inlined_call_operand.vmem [shape: f32[16,32], index: 1, kind: input, shape index: {}]
  %s2 = inlined_call_operand.vmem [shape: f32[1,32], index: 2, kind: input, shape index: {}]
  %s3 = inlined_call_operand.vmem [shape: f32[32,8], index: 3, kind: input, shape index: {}]
  %s4 = inlined_call_operand.vmem [shape: f32[1,8], index: 4, kind: input, shape index: {}]
  %s5 = inlined_call_operand.hbm [shape: f32[8,8], index: 5, kind: output, shape index: {}]
  %s6 = sld [smem:[#allocation0]]
  $region30: #{tpu_custom_call.1} parent=0
    _
  %s8 = ssub.s32 1, %s6
  %s9 = scalar_select 0, %s8, %s6
  $region1: #{tpu_custom_call.1} parent=0
    #allocation2 [shape = 'u8[4096]{0}', space=vmem, size = 0x1000, scoped, tag = 'output window, operand 0, single buffered']
    #allocation3 [shape = 's32[1]{0}', space=sflag, size = 0x4, scoped, tag = 'scoped memory for tpu_custom_call.1']
    %10 = vsyncpa [#allocation3], 0
    // Predicated region
    $region2: #{tpu_custom_call.1} parent=1 // pred_check
      _
    $region3: #{tpu_custom_call.1} parent=1 // pred_check_branch
      %12 = sbr.rel (0) target = $region5
    $region4: #{tpu_custom_call.1} parent=1 // pred_region
      _
    $region5: #{tpu_custom_call.1} parent=1 // pred_fallthru
      _
    // Predicated region
    $region6: #{tpu_custom_call.1} parent=1 // pred_check
      _
    $region7: #{tpu_custom_call.1} parent=1 // pred_check_branch
      %14 = sbr.rel (0) target = $region9
    $region8: #{tpu_custom_call.1} parent=1 // pred_region
      _
    $region9: #{tpu_custom_call.1} parent=1 // pred_fallthru
      _
    // Predicated region
    $region10: #{tpu_custom_call.1} parent=1 // pred_check
      _
    $region11: #{tpu_custom_call.1} parent=1 // pred_check_branch
      %16 = sbr.rel (0) target = $region13
    $region12: #{tpu_custom_call.1} parent=1 // pred_region
      _
    $region13: #{tpu_custom_call.1} parent=1 // pred_fallthru
      _
    // Predicated region
    $region14: #{tpu_custom_call.1} parent=1 // pred_check
      _
    $region15: #{tpu_custom_call.1} parent=1 // pred_check_branch
      %18 = sbr.rel (0) target = $region17
    $region16: #{tpu_custom_call.1} parent=1 // pred_region
      _
    $region17: #{tpu_custom_call.1} parent=1 // pred_fallthru
      _
    // Predicated region
    $region18: #{tpu_custom_call.1} parent=1 // pred_check
      _
    $region19: #{tpu_custom_call.1} parent=1 // pred_check_branch
      %20 = sbr.rel (0) target = $region21
    $region20: #{tpu_custom_call.1} parent=1 // pred_region
      _
    $region21: #{tpu_custom_call.1} parent=1 // pred_fallthru
      _
    %v21 = vld [vmem:[%s0] sm:$0xff]
    %v22 = vld [vmem:[%s1] sm:$0xff]
    %v23 = vld [vmem:[%s1 + $0x8] sm:$0xff]
    %v24 = vld [vmem:[%s2] sm:$0x1]
    %v26 = vlaneseq
    %v27 = vshrl.u32 %v26, 7
    %v28 = vsub.s32 0, %v27
    %v29 = vrot.slane %v24, %v28
    %vm31 = vcmask 130048
    %v33 = vsel %vm31, %v21, 0
    %35 = vmatprep.subr.mxu0 0.0
    %36 = vmatpush1.msra.mxu0 0.0
    %37 = vmatprep.subr.mxu0 0.0
    %38 = vmatpush1.msra.mxu0 0.0
    %39 = vmatprep.subr.mxu0 0.0
    %40 = vmatpush1.msra.mxu0 0.0
    %41 = vmatprep.subr.mxu0 0.0
    %42 = vmatpush1.msra.mxu0 0.0
    %43 = vmatprep.subr.mxu0 0.0
    %44 = vmatpush1.msra.mxu0 0.0
    %45 = vmatprep.subr.mxu0 0.0
    %46 = vmatpush1.msra.mxu0 0.0
    %47 = vmatprep.subr.mxu0 0.0
    %48 = vmatpush1.msra.mxu0 0.0
    %49 = vmatprep.subr.mxu0 0.0
    %50 = vmatpush1.msra.mxu0 0.0
    %51 = vmatprep.subr.mxu0 0.0
    %52 = vmatpush1.msra.mxu0 0.0
    %53 = vmatprep.subr.mxu0 0.0
    %54 = vmatpush1.msra.mxu0 0.0
    %55 = vmatprep.subr.mxu0 0.0
    %56 = vmatpush1.msra.mxu0 0.0
    %57 = vmatprep.subr.mxu0 0.0
    %58 = vmatpush1.msra.mxu0 0.0
    %59 = vmatprep.subr.mxu0 0.0
    %60 = vmatpush1.msra.mxu0 0.0
    %61 = vmatprep.subr.mxu0 0.0
    %62 = vmatpush1.msra.mxu0 0.0
    %63 = vmatprep.subr.mxu0 0.0
    %64 = vmatpush1.msra.mxu0 %v23
    %65 = vmatprep.subr.mxu0 0.0
    %66 = vmatpush1.msra.mxu0 %v22
    %67 = vmatprep.subr.mxu0 0.0
    %68 = vmatpush2.msra.mxu0 0.0
    %69 = vmatprep.subr.mxu0 0.0
    %70 = vmatpush2.msra.mxu0 0.0
    %71 = vmatprep.subr.mxu0 0.0
    %72 = vmatpush2.msra.mxu0 0.0
    %73 = vmatprep.subr.mxu0 0.0
    %74 = vmatpush2.msra.mxu0 0.0
    %75 = vmatprep.subr.mxu0 0.0
    %76 = vmatpush2.msra.mxu0 0.0
    %77 = vmatprep.subr.mxu0 0.0
    %78 = vmatpush2.msra.mxu0 0.0
    %79 = vmatprep.subr.mxu0 0.0
    %80 = vmatpush2.msra.mxu0 0.0
    %81 = vmatprep.subr.mxu0 0.0
    %82 = vmatpush2.msra.mxu0 0.0
    %83 = vmatprep.subr.mxu0 0.0
    %84 = vmatpush2.msra.mxu0 0.0
    %85 = vmatprep.subr.mxu0 0.0
    %86 = vmatpush2.msra.mxu0 0.0
    %87 = vmatprep.subr.mxu0 0.0
    %88 = vmatpush2.msra.mxu0 0.0
    %89 = vmatprep.subr.mxu0 0.0
    %90 = vmatpush2.msra.mxu0 0.0
    %91 = vmatprep.subr.mxu0 0.0
    %92 = vmatpush2.msra.mxu0 0.0
    %93 = vmatprep.subr.mxu0 0.0
    %94 = vmatpush2.msra.mxu0 0.0
    %95 = vmatprep.subr.mxu0 0.0
    %96 = vmatpush2.msra.mxu0 0.0
    %97 = vmatprep.subr.mxu0 0.0
    %98 = vmatpush2.msra.mxu0 0.0
    %99 = vmatprep.mubr.f32.mxu0 0.0
    %100 = vmatmul.mubr.f32.gmra.mxu0 %v33
    %v101 = vpop.f32.mrf.mxu0
    %v102 = vadd.f32 %v29, %v101
    %v103 = vpop.f32.mrf.mxu0
    %104 = vdwg.mxu0
    %v105 = vmax.f32 %v102, 0.0
    %v106 = vld [vmem:[%s3] sm:$0xff]
    %v107 = vld [vmem:[%s3 + $0x8] sm:$0xff]
    %v108 = vld [vmem:[%s3 + $0x10] sm:$0xff]
    %v109 = vld [vmem:[%s3 + $0x18] sm:$0xff]
    %v110 = vld [vmem:[%s4] sm:$0x1]
    %v112 = vlaneseq
    %v113 = vshrl.u32 %v112, 7
    %v114 = vsub.s32 0, %v113
    %v115 = vrot.slane %v110, %v114
    %vm117 = vcmask 261120
    %v119 = vsel %vm117, %v105, 0
    %121 = vmatprep.subr.mxu0 0.0
    %122 = vmatpush1.msra.mxu0 0.0
    %123 = vmatprep.subr.mxu0 0.0
    %124 = vmatpush1.msra.mxu0 0.0
    %125 = vmatprep.subr.mxu0 0.0
    %126 = vmatpush1.msra.mxu0 0.0
    %127 = vmatprep.subr.mxu0 0.0
    %128 = vmatpush1.msra.mxu0 0.0
    %129 = vmatprep.subr.mxu0 0.0
    %130 = vmatpush1.msra.mxu0 0.0
    %131 = vmatprep.subr.mxu0 0.0
    %132 = vmatpush1.msra.mxu0 0.0
    %133 = vmatprep.subr.mxu0 0.0
    %134 = vmatpush1.msra.mxu0 0.0
    %135 = vmatprep.subr.mxu0 0.0
    %136 = vmatpush1.msra.mxu0 0.0
    %137 = vmatprep.subr.mxu0 0.0
    %138 = vmatpush1.msra.mxu0 0.0
    %139 = vmatprep.subr.mxu0 0.0
    %140 = vmatpush1.msra.mxu0 0.0
    %141 = vmatprep.subr.mxu0 0.0
    %142 = vmatpush1.msra.mxu0 0.0
    %143 = vmatprep.subr.mxu0 0.0
    %144 = vmatpush1.msra.mxu0 0.0
    %145 = vmatprep.subr.mxu0 0.0
    %146 = vmatpush1.msra.mxu0 %v109
    %147 = vmatprep.subr.mxu0 0.0
    %148 = vmatpush1.msra.mxu0 %v108
    %149 = vmatprep.subr.mxu0 0.0
    %150 = vmatpush1.msra.mxu0 %v107
    %151 = vmatprep.subr.mxu0 0.0
    %152 = vmatpush1.msra.mxu0 %v106
    %153 = vmatprep.subr.mxu0 0.0
    %154 = vmatpush2.msra.mxu0 0.0
    %155 = vmatprep.subr.mxu0 0.0
    %156 = vmatpush2.msra.mxu0 0.0
    %157 = vmatprep.subr.mxu0 0.0
    %158 = vmatpush2.msra.mxu0 0.0
    %159 = vmatprep.subr.mxu0 0.0
    %160 = vmatpush2.msra.mxu0 0.0
    %161 = vmatprep.subr.mxu0 0.0
    %162 = vmatpush2.msra.mxu0 0.0
    %163 = vmatprep.subr.mxu0 0.0
    %164 = vmatpush2.msra.mxu0 0.0
    %165 = vmatprep.subr.mxu0 0.0
    %166 = vmatpush2.msra.mxu0 0.0
    %167 = vmatprep.subr.mxu0 0.0
    %168 = vmatpush2.msra.mxu0 0.0
    %169 = vmatprep.subr.mxu0 0.0
    %170 = vmatpush2.msra.mxu0 0.0
    %171 = vmatprep.subr.mxu0 0.0
    %172 = vmatpush2.msra.mxu0 0.0
    %173 = vmatprep.subr.mxu0 0.0
    %174 = vmatpush2.msra.mxu0 0.0
    %175 = vmatprep.subr.mxu0 0.0
    %176 = vmatpush2.msra.mxu0 0.0
    %177 = vmatprep.subr.mxu0 0.0
    %178 = vmatpush2.msra.mxu0 0.0
    %179 = vmatprep.subr.mxu0 0.0
    %180 = vmatpush2.msra.mxu0 0.0
    %181 = vmatprep.subr.mxu0 0.0
    %182 = vmatpush2.msra.mxu0 0.0
    %183 = vmatprep.subr.mxu0 0.0
    %184 = vmatpush2.msra.mxu0 0.0
    %185 = vmatprep.mubr.f32.mxu0 0.0
    %186 = vmatmul.mubr.f32.gmra.mxu0 %v119
    %v187 = vpop.f32.mrf.mxu0
    %v188 = vadd.f32 %v115, %v187
    %v189 = vpop.f32.mrf.mxu0
    %190 = vdwg.mxu0
    %vm191 = vcmask 64512
    %192 = vst.msk [vmem:[#allocation2] sm:$0xff] %vm191, %v188
    // Predicated region
    $region22: #{tpu_custom_call.1} parent=1 // pred_check
      _
    $region23: #{tpu_custom_call.1} parent=1 // pred_check_branch
      %194 = sbr.rel (0) target = $region25
    $region24: #{tpu_custom_call.1} parent=1 // pred_region
      %s196 = ssub.s32 128, 128
      %197 = vsyncadd [#allocation3], %s196
      %s199 = sshll.u32 [#allocation2], 4
      %s200 = int_to_ptr.vmem [resolvable:$true] %s199
      %202 = dma.vmem_to_hbm [thread:$0]  %s200, 128, %s5, [#allocation3]
    $region25: #{tpu_custom_call.1} parent=1 // pred_fallthru
      _
    // Predicated region
    $region26: #{tpu_custom_call.1} parent=1 // pred_check
      _
    $region27: #{tpu_custom_call.1} parent=1 // pred_check_branch
      %204 = sbr.rel (0) target = $region29
    $region28: #{tpu_custom_call.1} parent=1 // pred_region
      %205 = dma.done [#allocation3], 128
    $region29: #{tpu_custom_call.1} parent=1 // pred_fallthru
      _
    %206 = vsyncpa [#allocation3], 1

</llo_original>
